<compile_context>
chip_gen: v5e
topology: v5e:2x2
jax: 0.10.0
libtpu: 0.0.40
codegen_flags: <defaults>
</compile_context>

<pallas_src>
import functools

import jax
import jax.numpy as jnp
from jax.experimental import pallas as pl
from jax.experimental.pallas import tpu as pltpu


_LANE = 128        # lane width
_SUBLANE = 8       # f32 sublane tiling
_TK_MAX = 2048     # K-tile cap (multiple of 128)
_TB_MAX = 8192     # batch-tile cap (bounds the static finalize unroll to 64)


def _round_up(v, m):
    return ((v + m - 1) // m) * m


def _vmem_config():
    """Returns (per-step tile budget, explicit scoped-VMEM limit) per chip gen."""
    try:
        vmem_cap = pltpu.get_tpu_info().vmem_capacity_bytes
    except Exception:                       # conservative (v7x-sized) fallback
        vmem_cap = 64 * 1024 * 1024
    if vmem_cap <= 64 * 1024 * 1024:        # v7x-class core: 64 MiB physical
        # ~10-12 MiB x buffers (review: larger steps amortize the ~0.35us
        # per-grid-step overhead at 3.2 TB/s), total kernel <= ~48 MiB.
        return 24 * 1024 * 1024, 48 * 1024 * 1024
    # v5e / v6e: 128 MiB physical VMEM; ~8 MiB x buffers are already <5%
    # step overhead at 0.8-1.4 TB/s.
    return 18 * 1024 * 1024, 96 * 1024 * 1024


def _choose_tiles(B, F, x_itemsize, tile_budget_bytes):
    """Pick (TB, TK, nk) so every lane/sublane-padded buffer fits the budget."""
    # K tiling: lane-dense blocks; ragged F is handled by partial blocks plus
    # in-kernel masking, so no wrapper-side padding (and no padded HBM reads).
    tk = min(_round_up(F, _LANE), _TK_MAX)
    nk = pl.cdiv(F, tk)
    # Per batch row the VMEM footprint is:
    #   2 * tk * x_itemsize        double-buffered x tile
    #   + _LANE * 4                (TB, 128) f32 accumulator scratch
    #   + 2 * _SUBLANE * 4         double-buffered (1,1,TB) out block
    #                              (sublane-padded to 8 rows)
    per_row = 2 * tk * x_itemsize + _LANE * 4 + 2 * _SUBLANE * 4
    tb = (tile_budget_bytes // per_row) // _LANE * _LANE
    tb = max(_LANE, min(tb, _TB_MAX))
    # v7x megacore: keep nb >= ~4 (when B allows) so the "parallel" batch axis
    # actually shards across both TensorCores.
    if B > _LANE:
        tb = min(tb, max(_LANE, _round_up(pl.cdiv(B, 4), _LANE)))
    tb = min(tb, _round_up(B, _LANE))
    return tb, tk, nk


def _review_classifier_kernel(x_ref, w_ref, b_ref, o_ref, acc_ref, *,
                              apply_sigmoid: bool, num_features: int,
                              needs_mask: bool):
    # x_ref: (TB, TK) VMEM, w_ref: (1, TK) VMEM, b_ref: (1,) SMEM,
    # o_ref: (1, 1, TB) VMEM (lane-dense over batch),
    # acc_ref: (TB, 128) f32 VMEM scratch.
    k = pl.program_id(1)
    tb, tk = x_ref.shape
    n_chunks = tk // _LANE

    @pl.when(k == 0)
    def _init():
        acc_ref[...] = jnp.zeros_like(acc_ref)

    # VPU multiply-accumulate over the 128-lane chunks of this K tile.
    base = k * tk
    lane_ids = jax.lax.broadcasted_iota(jnp.int32, (1, _LANE), 1)
    for c in range(n_chunks):                       # static unroll (<= 16)
        sl = slice(c * _LANE, (c + 1) * _LANE)
        xc = x_ref[:, sl].astype(jnp.float32)       # (TB, 128)
        wc = w_ref[:, sl].astype(jnp.float32)       # (1, 128) sublane-broadcast
        prod = xc * wc
        if needs_mask:
            # Only emitted when F is not a multiple of TK: zero the columns
            # past num_features (the partial last K block holds garbage there).
            col = lane_ids + (base + c * _LANE)
            prod = jnp.where(col < num_features, prod, 0.0)
        acc_ref[...] += prod

    @pl.when(k == pl.num_programs(1) - 1)
    def _finalize():
        bias = b_ref[0]
        # Reduce the (TB, 128) accumulator to per-row sums 128 rows at a time:
        # a native (128,128) XLU transpose + sublane reduce lands the batch
        # dimension on lanes, so the output store is lane-dense (unmasked vst,
        # contiguous writeback DMA).
        for r in range(tb // _LANE):                # static unroll (<= 64)
            rs = slice(r * _LANE, (r + 1) * _LANE)
            blk_t = jnp.transpose(acc_ref[rs, :])                 # (128, 128)
            row = jnp.sum(blk_t, axis=0, keepdims=True) + bias    # (1, 128)
            if apply_sigmoid:                       # static flag, baked in
                row = jax.nn.sigmoid(row)
            o_ref[:, :, rs] = row.reshape(1, 1, _LANE).astype(o_ref.dtype)


def review_classifier_forward(x_in, weight, bias, apply_sigmoid: bool = False):
    """Forward pass of ReviewClassifier.

    Args:
      x_in:   (B, F) float32 or bfloat16 (bf16 ~halves HBM traffic; the
              accumulation is always float32)
      weight: (1, F) same-ish dtype as x_in (nn.Linear.weight convention)
      bias:   (1,)
      apply_sigmoid: static bool
    Returns:
      (B,) float32
    """
    B, F = x_in.shape
    assert weight.shape == (1, F), "weight must be (1, num_features)"
    assert bias.shape == (1,), "bias must be (1,)"

    x_itemsize = jnp.dtype(x_in.dtype).itemsize
    w_itemsize = jnp.dtype(weight.dtype).itemsize
    tile_budget, vmem_limit = _vmem_config()
    tb, tk, nk = _choose_tiles(B, F, x_itemsize, tile_budget)
    nb = pl.cdiv(B, tb)
    needs_mask = (F % tk) != 0

    kernel = functools.partial(_review_classifier_kernel,
                               apply_sigmoid=bool(apply_sigmoid),
                               num_features=F,
                               needs_mask=needs_mask)

    cost = pl.CostEstimate(
        flops=2 * B * F,
        transcendentals=B if apply_sigmoid else 0,
        # Weight is re-fetched once per batch tile (K is the inner grid axis).
        bytes_accessed=(x_itemsize * B * F          # x
                        + w_itemsize * nb * F       # weight, nb fetches
                        + 4                         # bias
                        + 4 * nb * tb),             # lane-dense f32 output
    )

    out = pl.pallas_call(
        kernel,
        out_shape=jax.ShapeDtypeStruct((nb, 1, tb), jnp.float32),
        grid_spec=pltpu.PrefetchScalarGridSpec(
            num_scalar_prefetch=0,
            grid=(nb, nk),
            in_specs=[
                pl.BlockSpec((tb, tk), lambda i, k: (i, k)),    # x tile
                pl.BlockSpec((1, tk), lambda i, k: (0, k)),     # weight row
                pl.BlockSpec(memory_space=pltpu.SMEM),          # bias scalar
            ],
            out_specs=pl.BlockSpec((1, 1, tb), lambda i, k: (i, 0, 0)),
            scratch_shapes=[pltpu.VMEM((tb, _LANE), jnp.float32)],
        ),
        compiler_params=pltpu.CompilerParams(
            dimension_semantics=("parallel", "arbitrary"),
            vmem_limit_bytes=vmem_limit,
        ),
        cost_estimate=cost,
    )(x_in, weight, bias.astype(jnp.float32))

    # squeeze() + drop rows that only exist because of batch-tile rounding.
    return out.reshape(nb * tb)[:B]


if __name__ == "__main__":
    key = jax.random.PRNGKey(0)

    def run_case(B, F, dtype=jnp.float32, tol=1e-4):
        kx, kw, kb = jax.random.split(jax.random.fold_in(key, B * 131 + F), 3)
        x = jax.random.normal(kx, (B, F), dtype=jnp.float32).astype(dtype)
        bound = 1.0 / (F ** 0.5)       # nn.Linear-style uniform init
        weight = jax.random.uniform(kw, (1, F), minval=-bound, maxval=bound,
                                    dtype=jnp.float32).astype(dtype)
        bias = jax.random.uniform(kb, (1,), minval=-bound, maxval=bound,
                                  dtype=jnp.float32)

        y_logits = review_classifier_forward(x, weight, bias,
                                             apply_sigmoid=False)
        y_probs = review_classifier_forward(x, weight, bias,
                                            apply_sigmoid=True)
        jax.block_until_ready(y_logits)
        jax.block_until_ready(y_probs)

        xf = x.astype(jnp.float32)
        wf = weight.astype(jnp.float32)
        ref_logits = jnp.sum(xf * wf, axis=1) + bias[0]
        ref_probs = jax.nn.sigmoid(ref_logits)

        assert y_logits.shape == (B,)
        assert y_probs.shape == (B,)
        assert jnp.allclose(y_logits, ref_logits, atol=tol, rtol=tol)
        assert jnp.allclose(y_probs, ref_probs, atol=tol, rtol=tol)

    # Small, module-consistent shapes: batch=8, num_features=128.
    run_case(8, 128)
    # Ragged case: B not a multiple of 8, F not a multiple of 128 -> exercises
    # partial blocks on both axes plus in-kernel column masking.
    run_case(13, 300)
    # F > TK -> exercises the K-grid accumulator and the masked last K block.
    run_case(16, 3000)
    # bf16 bandwidth path (f32 accumulation inside the kernel).
    run_case(200, 1000, dtype=jnp.bfloat16, tol=2e-2)

    print("KERNEL_OK")
</pallas_src>

<mosaic_0001>
module attributes {stable_mosaic.version = 11 : i64} {
  func.func @_review_classifier_kernel(%arg0: i32, %arg1: i32, %arg2: memref<128x128xf32, #tpu.memory_space<vmem>>, %arg3: memref<1x128xf32, #tpu.memory_space<vmem>>, %arg4: memref<1xf32, #tpu.memory_space<smem>>, %arg5: memref<1x1x128xf32, #tpu.memory_space<vmem>>, %arg6: memref<128x128xf32, #tpu.memory_space<vmem>>) attributes {dimension_semantics = [#tpu.dimension_semantics<parallel>, #tpu.dimension_semantics<arbitrary>], iteration_bounds = array<i64: 1, 1>, scalar_prefetch = 0 : i64, scratch_operands = 1 : i64, tpu.core_type = #tpu.core_type<tc>, window_params = [{transform_indices = @transform_0, window_bounds = array<i64: 128, 128>}, {transform_indices = @transform_1, window_bounds = array<i64: 1, 128>}, {transform_indices = @transform_2, window_bounds = array<i64: 1>}, {transform_indices = @transform_3, window_bounds = array<i64: 1, 1, 128>}]} {
    %c0_i32 = arith.constant 0 : i32
    %0 = arith.cmpi eq, %arg1, %c0_i32 : i32
    %1 = arith.extui %0 : i1 to i32
    %c0_i32_0 = arith.constant 0 : i32
    %2 = arith.cmpi ne, %1, %c0_i32_0 : i32
    scf.if %2 {
      %cst = arith.constant 0.000000e+00 : f32
      %13 = vector.broadcast %cst : f32 to vector<128x128xf32>
      %c0_10 = arith.constant 0 : index
      %c0_11 = arith.constant 0 : index
      %14 = vector.load %arg6[%c0_10, %c0_11] : memref<128x128xf32, #tpu.memory_space<vmem>>, vector<128x128xf32>
      tpu.vector_store %arg6[%c0_10, %c0_11], %13 {strides = array<i32>} : memref<128x128xf32, #tpu.memory_space<vmem>>, vector<128x128xf32>,
    } else {
    }
    %c0 = arith.constant 0 : index
    %c0_1 = arith.constant 0 : index
    %3 = vector.load %arg2[%c0, %c0_1] : memref<128x128xf32, #tpu.memory_space<vmem>>, vector<128x128xf32>
    %c0_2 = arith.constant 0 : index
    %c0_3 = arith.constant 0 : index
    %4 = vector.load %arg3[%c0_2, %c0_3] : memref<1x128xf32, #tpu.memory_space<vmem>>, vector<1x128xf32>
    %5 = vector.broadcast %4 : vector<1x128xf32> to vector<128x128xf32>
    %6 = arith.mulf %3, %5 : vector<128x128xf32>
    %c0_4 = arith.constant 0 : index
    %c0_5 = arith.constant 0 : index
    %7 = vector.load %arg6[%c0_4, %c0_5] : memref<128x128xf32, #tpu.memory_space<vmem>>, vector<128x128xf32>
    %8 = arith.addf %7, %6 : vector<128x128xf32>
    %c0_6 = arith.constant 0 : index
    %c0_7 = arith.constant 0 : index
    %9 = vector.load %arg6[%c0_6, %c0_7] : memref<128x128xf32, #tpu.memory_space<vmem>>, vector<128x128xf32>
    tpu.vector_store %arg6[%c0_6, %c0_7], %8 {strides = array<i32>} : memref<128x128xf32, #tpu.memory_space<vmem>>, vector<128x128xf32>,
    %c0_i32_8 = arith.constant 0 : i32
    %10 = arith.cmpi eq, %arg1, %c0_i32_8 : i32
    %11 = arith.extui %10 : i1 to i32
    %c0_i32_9 = arith.constant 0 : i32
    %12 = arith.cmpi ne, %11, %c0_i32_9 : i32
    scf.if %12 {
      %c0_10 = arith.constant 0 : index
      %13 = memref.load %arg4[%c0_10] : memref<1xf32, #tpu.memory_space<smem>>
      %c0_11 = arith.constant 0 : index
      %c0_12 = arith.constant 0 : index
      %14 = vector.load %arg6[%c0_11, %c0_12] : memref<128x128xf32, #tpu.memory_space<vmem>>, vector<128x128xf32>
      %15 = tpu.transpose %14, [1, 0] : vector<128x128xf32> -> vector<128x128xf32>
      %cst = arith.constant dense<0.000000e+00> : vector<128xf32>
      %16 = vector.multi_reduction <add>, %15, %cst [0] : vector<128x128xf32> to vector<128xf32>
      %17 = vector.shape_cast %16 : vector<128xf32> to vector<1x128xf32>
      %18 = vector.broadcast %13 : f32 to vector<1x128xf32>
      %19 = arith.addf %17, %18 : vector<1x128xf32>
      %20 = vector.shape_cast %19 : vector<1x128xf32> to vector<1x1x128xf32>
      %c0_13 = arith.constant 0 : index
      %c0_14 = arith.constant 0 : index
      %c0_15 = arith.constant 0 : index
      %21 = vector.load %arg5[%c0_13, %c0_14, %c0_15] : memref<1x1x128xf32, #tpu.memory_space<vmem>>, vector<1x1x128xf32>
      tpu.vector_store %arg5[%c0_13, %c0_14, %c0_15], %20 {strides = array<i32>} : memref<1x1x128xf32, #tpu.memory_space<vmem>>, vector<1x1x128xf32>,
    } else {
    }
    return
  }
  func.func @transform_0(%arg0: i32, %arg1: i32) -> (i32, i32) {
    %c0_i32 = arith.constant 0 : i32
    return %arg0, %arg1 : i32, i32
  }
  func.func @transform_1(%arg0: i32, %arg1: i32) -> (i32, i32) {
    %c0_i32 = arith.constant 0 : i32
    %c0_i32_0 = arith.constant 0 : i32
    return %c0_i32, %arg1 : i32, i32
  }
  func.func @transform_2(%arg0: i32, %arg1: i32) -> i32 {
    %c0_i32 = arith.constant 0 : i32
    %c0_i32_0 = arith.constant 0 : i32
    return %c0_i32 : i32
  }
  func.func @transform_3(%arg0: i32, %arg1: i32) -> (i32, i32, i32) {
    %c0_i32 = arith.constant 0 : i32
    %c0_i32_0 = arith.constant 0 : i32
    %c0_i32_1 = arith.constant 0 : i32
    return %arg0, %c0_i32, %c0_i32_0 : i32, i32, i32
  }
}

</mosaic_0001>

<llo_original>
// kernel: tpu_custom_call.1
$region0: #{tpu_custom_call.1}
  #allocation0 [shape = 'u32[]', space=smem, size = 0x4, offset = 0x4, fixed_abs, tag = 'smem constant byte address 0x4 - core index']
  #allocation1 [shape = 'u32[72,128]{1,0:T(1,128)}', space=vmem, size = 0x9000, scoped, tag = 'internal scratch']
  #allocation2 [shape = 'f32[128,128]{1,0:T(8,128)}', space=vmem, size = 0x10000, scoped, tag = 'scratch operand']
  #allocation3 [shape = 'f32[1]{0:T(128)S(6)}', space=smem, size = 0x200, scoped, tag = 'scoped memory for tpu_custom_call.1']
  %s0 = inlined_call_operand.hbm [shape: f32[8,128], index: 0, kind: input, shape index: {}]
  %s1 = inlined_call_operand.vmem [shape: f32[1,128], index: 1, kind: input, shape index: {}]
  %s2 = inlined_call_operand.<no memory space> [shape: f32[1], index: 2, kind: input, shape index: {}]
  %s3 = inlined_call_operand.hbm [shape: f32[1,1,128], index: 3, kind: output, shape index: {}]
  %s4 = sld [smem:[#allocation0]]
  $region34: #{tpu_custom_call.1} parent=0
    _
  %s6 = ssub.s32 1, %s4
  %s7 = scalar_select 0, %s6, %s4
  %8 = sst [smem:[#allocation3]] %s2
  $region1: #{tpu_custom_call.1} parent=0
    #allocation4 [shape = 'u8[65536]{0}', space=vmem, size = 0x10000, scoped, tag = 'input window, operand 0, single buffered']
    #allocation5 [shape = 's32[1]{0}', space=sflag, size = 0x4, scoped, tag = 'scoped memory for tpu_custom_call.1']
    #allocation6 [shape = 's32[1]{0}', space=sflag, size = 0x4, scoped, tag = 'scoped memory for tpu_custom_call.1']
    #allocation7 [shape = 'u8[512]{0}', space=vmem, size = 0x400, scoped, tag = 'output window, operand 0, single buffered']
    %9 = vsyncpa [#allocation5], 0
    %10 = vsyncpa [#allocation6], 0
    // Predicated region
    $region2: #{tpu_custom_call.1} parent=1 // pred_check
      _
    $region3: #{tpu_custom_call.1} parent=1 // pred_check_branch
      %12 = sbr.rel (0) target = $region5
    $region4: #{tpu_custom_call.1} parent=1 // pred_region
      %14 = vsyncadd [#allocation5], 1920
      %s15 = sshll.u32 %s0, 4
      %s16 = int_to_ptr.hbm [resolvable:$true] %s15
      %s17 = sshll.u32 [#allocation4], 4
      %s18 = int_to_ptr.vmem [resolvable:$true] %s17
      %23 = dma.hbm_to_vmem [thread:$0]  %s16, 128, %s18, [#allocation5], 128, 128, 8
    $region5: #{tpu_custom_call.1} parent=1 // pred_fallthru
      _
    // Predicated region
    $region6: #{tpu_custom_call.1} parent=1 // pred_check
      _
    $region7: #{tpu_custom_call.1} parent=1 // pred_check_branch
      %25 = sbr.rel (0) target = $region9
    $region8: #{tpu_custom_call.1} parent=1 // pred_region
      _
    $region9: #{tpu_custom_call.1} parent=1 // pred_fallthru
      _
    // Predicated region
    $region10: #{tpu_custom_call.1} parent=1 // pred_check
      _
    $region11: #{tpu_custom_call.1} parent=1 // pred_check_branch
      %27 = sbr.rel (0) target = $region13
    $region12: #{tpu_custom_call.1} parent=1 // pred_region
      _
    $region13: #{tpu_custom_call.1} parent=1 // pred_fallthru
      _
    // Predicated region
    $region14: #{tpu_custom_call.1} parent=1 // pred_check
      _
    $region15: #{tpu_custom_call.1} parent=1 // pred_check_branch
      %29 = sbr.rel (0) target = $region17
    $region16: #{tpu_custom_call.1} parent=1 // pred_region
      %31 = dma.done [#allocation5], 2048
    $region17: #{tpu_custom_call.1} parent=1 // pred_fallthru
      _
    %p32 = scmp.eq.s32.totalorder 0, 0
    // Predicated region
    $region18: #{tpu_custom_call.1} parent=1 // pred_check
      %p33 = pneg %p32
    $region19: #{tpu_custom_call.1} parent=1 // pred_check_branch
      %35 = sbr.rel (%p33) target = $region21
    $region20: #{tpu_custom_call.1} parent=1 // pred_region
      %36 = vst [vmem:[#allocation2] sm:$0xff] 0.0
      %37 = vst [vmem:[#allocation2 + $0x8] sm:$0xff] 0.0
      %38 = vst [vmem:[#allocation2 + $0x10] sm:$0xff] 0.0
      %39 = vst [vmem:[#allocation2 + $0x18] sm:$0xff] 0.0
      %40 = vst [vmem:[#allocation2 + $0x20] sm:$0xff] 0.0
      %41 = vst [vmem:[#allocation2 + $0x28] sm:$0xff] 0.0
      %42 = vst [vmem:[#allocation2 + $0x30] sm:$0xff] 0.0
      %43 = vst [vmem:[#allocation2 + $0x38] sm:$0xff] 0.0
      %44 = vst [vmem:[#allocation2 + $0x40] sm:$0xff] 0.0
      %45 = vst [vmem:[#allocation2 + $0x48] sm:$0xff] 0.0
      %46 = vst [vmem:[#allocation2 + $0x50] sm:$0xff] 0.0
      %47 = vst [vmem:[#allocation2 + $0x58] sm:$0xff] 0.0
      %48 = vst [vmem:[#allocation2 + $0x60] sm:$0xff] 0.0
      %49 = vst [vmem:[#allocation2 + $0x68] sm:$0xff] 0.0
      %50 = vst [vmem:[#allocation2 + $0x70] sm:$0xff] 0.0
      %51 = vst [vmem:[#allocation2 + $0x78] sm:$0xff] 0.0
    $region21: #{tpu_custom_call.1} parent=1 // pred_fallthru
      _
    %v52 = vld [vmem:[#allocation4] sm:$0xff]
    %v53 = vld [vmem:[#allocation4 + $0x8] sm:$0xff]
    %v54 = vld [vmem:[#allocation4 + $0x10] sm:$0xff]
    %v55 = vld [vmem:[#allocation4 + $0x18] sm:$0xff]
    %v56 = vld [vmem:[#allocation4 + $0x20] sm:$0xff]
    %v57 = vld [vmem:[#allocation4 + $0x28] sm:$0xff]
    %v58 = vld [vmem:[#allocation4 + $0x30] sm:$0xff]
    %v59 = vld [vmem:[#allocation4 + $0x38] sm:$0xff]
    %v60 = vld [vmem:[#allocation4 + $0x40] sm:$0xff]
    %v61 = vld [vmem:[#allocation4 + $0x48] sm:$0xff]
    %v62 = vld [vmem:[#allocation4 + $0x50] sm:$0xff]
    %v63 = vld [vmem:[#allocation4 + $0x58] sm:$0xff]
    %v64 = vld [vmem:[#allocation4 + $0x60] sm:$0xff]
    %v65 = vld [vmem:[#allocation4 + $0x68] sm:$0xff]
    %v66 = vld [vmem:[#allocation4 + $0x70] sm:$0xff]
    %v67 = vld [vmem:[#allocation4 + $0x78] sm:$0xff]
    %v68 = vld [vmem:[%s1] sm:$0x1]
    %v70 = vperm.slane %v68, 0
    %v72 = vmul.f32 %v52, %v70
    %v73 = vmul.f32 %v53, %v70
    %v74 = vmul.f32 %v54, %v70
    %v75 = vmul.f32 %v55, %v70
    %v76 = vmul.f32 %v56, %v70
    %v77 = vmul.f32 %v57, %v70
    %v78 = vmul.f32 %v58, %v70
    %v79 = vmul.f32 %v59, %v70
    %v80 = vmul.f32 %v60, %v70
    %v81 = vmul.f32 %v61, %v70
    %v82 = vmul.f32 %v62, %v70
    %v83 = vmul.f32 %v63, %v70
    %v84 = vmul.f32 %v64, %v70
    %v85 = vmul.f32 %v65, %v70
    %v86 = vmul.f32 %v66, %v70
    %v87 = vmul.f32 %v67, %v70
    %v88 = vld [vmem:[#allocation2] sm:$0xff]
    %v89 = vld [vmem:[#allocation2 + $0x8] sm:$0xff]
    %v90 = vld [vmem:[#allocation2 + $0x10] sm:$0xff]
    %v91 = vld [vmem:[#allocation2 + $0x18] sm:$0xff]
    %v92 = vld [vmem:[#allocation2 + $0x20] sm:$0xff]
    %v93 = vld [vmem:[#allocation2 + $0x28] sm:$0xff]
    %v94 = vld [vmem:[#allocation2 + $0x30] sm:$0xff]
    %v95 = vld [vmem:[#allocation2 + $0x38] sm:$0xff]
    %v96 = vld [vmem:[#allocation2 + $0x40] sm:$0xff]
    %v97 = vld [vmem:[#allocation2 + $0x48] sm:$0xff]
    %v98 = vld [vmem:[#allocation2 + $0x50] sm:$0xff]
    %v99 = vld [vmem:[#allocation2 + $0x58] sm:$0xff]
    %v100 = vld [vmem:[#allocation2 + $0x60] sm:$0xff]
    %v101 = vld [vmem:[#allocation2 + $0x68] sm:$0xff]
    %v102 = vld [vmem:[#allocation2 + $0x70] sm:$0xff]
    %v103 = vld [vmem:[#allocation2 + $0x78] sm:$0xff]
    %v104 = vadd.f32 %v88, %v72
    %v105 = vadd.f32 %v89, %v73
    %v106 = vadd.f32 %v90, %v74
    %v107 = vadd.f32 %v91, %v75
    %v108 = vadd.f32 %v92, %v76
    %v109 = vadd.f32 %v93, %v77
    %v110 = vadd.f32 %v94, %v78
    %v111 = vadd.f32 %v95, %v79
    %v112 = vadd.f32 %v96, %v80
    %v113 = vadd.f32 %v97, %v81
    %v114 = vadd.f32 %v98, %v82
    %v115 = vadd.f32 %v99, %v83
    %v116 = vadd.f32 %v100, %v84
    %v117 = vadd.f32 %v101, %v85
    %v118 = vadd.f32 %v102, %v86
    %v119 = vadd.f32 %v103, %v87
    %120 = vst [vmem:[#allocation2] sm:$0xff] %v104
    %121 = vst [vmem:[#allocation2 + $0x8] sm:$0xff] %v105
    %122 = vst [vmem:[#allocation2 + $0x10] sm:$0xff] %v106
    %123 = vst [vmem:[#allocation2 + $0x18] sm:$0xff] %v107
    %124 = vst [vmem:[#allocation2 + $0x20] sm:$0xff] %v108
    %125 = vst [vmem:[#allocation2 + $0x28] sm:$0xff] %v109
    %126 = vst [vmem:[#allocation2 + $0x30] sm:$0xff] %v110
    %127 = vst [vmem:[#allocation2 + $0x38] sm:$0xff] %v111
    %128 = vst [vmem:[#allocation2 + $0x40] sm:$0xff] %v112
    %129 = vst [vmem:[#allocation2 + $0x48] sm:$0xff] %v113
    %130 = vst [vmem:[#allocation2 + $0x50] sm:$0xff] %v114
    %131 = vst [vmem:[#allocation2 + $0x58] sm:$0xff] %v115
    %132 = vst [vmem:[#allocation2 + $0x60] sm:$0xff] %v116
    %133 = vst [vmem:[#allocation2 + $0x68] sm:$0xff] %v117
    %134 = vst [vmem:[#allocation2 + $0x70] sm:$0xff] %v118
    %135 = vst [vmem:[#allocation2 + $0x78] sm:$0xff] %v119
    // Predicated region
    $region22: #{tpu_custom_call.1} parent=1 // pred_check
      %p136 = pneg %p32
    $region23: #{tpu_custom_call.1} parent=1 // pred_check_branch
      %138 = sbr.rel (%p136) target = $region25
    $region24: #{tpu_custom_call.1} parent=1 // pred_region
      %s139 = sld [smem:[#allocation3]]
      %v140 = vld [vmem:[#allocation2] sm:$0xff]
      %v141 = vld [vmem:[#allocation2 + $0x8] sm:$0xff]
      %v142 = vld [vmem:[#allocation2 + $0x10] sm:$0xff]
      %v143 = vld [vmem:[#allocation2 + $0x18] sm:$0xff]
      %v144 = vld [vmem:[#allocation2 + $0x20] sm:$0xff]
      %v145 = vld [vmem:[#allocation2 + $0x28] sm:$0xff]
      %v146 = vld [vmem:[#allocation2 + $0x30] sm:$0xff]
      %v147 = vld [vmem:[#allocation2 + $0x38] sm:$0xff]
      %v148 = vld [vmem:[#allocation2 + $0x40] sm:$0xff]
      %v149 = vld [vmem:[#allocation2 + $0x48] sm:$0xff]
      %v150 = vld [vmem:[#allocation2 + $0x50] sm:$0xff]
      %v151 = vld [vmem:[#allocation2 + $0x58] sm:$0xff]
      %v152 = vld [vmem:[#allocation2 + $0x60] sm:$0xff]
      %v153 = vld [vmem:[#allocation2 + $0x68] sm:$0xff]
      %v154 = vld [vmem:[#allocation2 + $0x70] sm:$0xff]
      %v155 = vld [vmem:[#allocation2 + $0x78] sm:$0xff]
      %156 = vxpose.xlu0.b32.start [1/16] %v140, 128
      %157 = vxpose.xlu0.b32.cont [2/16] %v141, 128
      %158 = vxpose.xlu0.b32.cont [3/16] %v142, 128
      %159 = vxpose.xlu0.b32.cont [4/16] %v143, 128
      %160 = vxpose.xlu0.b32.cont [5/16] %v144, 128
      %161 = vxpose.xlu0.b32.cont [6/16] %v145, 128
      %162 = vxpose.xlu0.b32.cont [7/16] %v146, 128
      %163 = vxpose.xlu0.b32.cont [8/16] %v147, 128
      %164 = vxpose.xlu0.b32.cont [9/16] %v148, 128
      %165 = vxpose.xlu0.b32.cont [10/16] %v149, 128
      %166 = vxpose.xlu0.b32.cont [11/16] %v150, 128
      %167 = vxpose.xlu0.b32.cont [12/16] %v151, 128
      %168 = vxpose.xlu0.b32.cont [13/16] %v152, 128
      %169 = vxpose.xlu0.b32.cont [14/16] %v153, 128
      %170 = vxpose.xlu0.b32.cont [15/16] %v154, 128
      %171 = vxpose.xlu0.b32.end [16/16] %v155, 128
      %v172 = vpop.trf.xlu0
      %v173 = vpop.trf.xlu0
      %v174 = vpop.trf.xlu0
      %v175 = vpop.trf.xlu0
      %v176 = vpop.trf.xlu0
      %v177 = vpop.trf.xlu0
      %v178 = vpop.trf.xlu0
      %v179 = vpop.trf.xlu0
      %v180 = vpop.trf.xlu0
      %v181 = vpop.trf.xlu0
      %v182 = vpop.trf.xlu0
      %v183 = vpop.trf.xlu0
      %v184 = vpop.trf.xlu0
      %v185 = vpop.trf.xlu0
      %v186 = vpop.trf.xlu0
      %v187 = vpop.trf.xlu0
      %v188 = vadd.f32 %v172, %v173
      %v189 = vadd.f32 %v188, %v174
      %v190 = vadd.f32 %v189, %v175
      %v191 = vadd.f32 %v190, %v176
      %v192 = vadd.f32 %v191, %v177
      %v193 = vadd.f32 %v192, %v178
      %v194 = vadd.f32 %v193, %v179
      %v195 = vadd.f32 %v194, %v180
      %v196 = vadd.f32 %v195, %v181
      %v197 = vadd.f32 %v196, %v182
      %v198 = vadd.f32 %v197, %v183
      %v199 = vadd.f32 %v198, %v184
      %v200 = vadd.f32 %v199, %v185
      %v201 = vadd.f32 %v200, %v186
      %v202 = vadd.f32 %v201, %v187
      %v203 = vrot.slane %v202, 4
      %v204 = vadd.f32 %v202, %v203
      %v205 = vrot.slane %v204, 2
      %v206 = vadd.f32 %v204, %v205
      %v207 = vrot.slane %v206, 1
      %v208 = vadd.f32 %v206, %v207
      %v209 = vstv %s139
      %v210 = vadd.f32 %v208, %v209
      %211 = vst [vmem:[#allocation7] sm:$0x1] %v210
    $region25: #{tpu_custom_call.1} parent=1 // pred_fallthru
      _
    // Predicated region
    $region26: #{tpu_custom_call.1} parent=1 // pred_check
      _
    $region27: #{tpu_custom_call.1} parent=1 // pred_check_branch
      %213 = sbr.rel (0) target = $region29
    $region28: #{tpu_custom_call.1} parent=1 // pred_region
      %215 = vsyncadd [#allocation6], 0
      %s217 = sshll.u32 [#allocation7], 4
      %s218 = int_to_ptr.vmem [resolvable:$true] %s217
      %s219 = sshll.u32 %s3, 4
      %s220 = int_to_ptr.hbm [resolvable:$true] %s219
      %222 = dma.vmem_to_hbm [thread:$0]  %s218, 16, %s220, [#allocation6]
    $region29: #{tpu_custom_call.1} parent=1 // pred_fallthru
      _
    // Predicated region
    $region30: #{tpu_custom_call.1} parent=1 // pred_check
      _
    $region31: #{tpu_custom_call.1} parent=1 // pred_check_branch
      %224 = sbr.rel (0) target = $region33
    $region32: #{tpu_custom_call.1} parent=1 // pred_region
      %226 = dma.done [#allocation6], 16
    $region33: #{tpu_custom_call.1} parent=1 // pred_fallthru
      _
    %227 = vsyncpa [#allocation5], 1
    %228 = vsyncpa [#allocation6], 1

</llo_original>
